<compile_context>
chip_gen: v7x
topology: tpu7x:2x2x1
jax: 0.10.0
libtpu: 0.0.40
codegen_flags: <defaults>
</compile_context>

<pallas_src>
import functools

import jax
import jax.numpy as jnp
from jax import lax
from jax.experimental import pallas as pl
from jax.experimental.pallas import tpu as pltpu


_VMEM_CAP = 56 << 20           # stay under v7x's 64 MiB physical VMEM
_QN_RESIDENT_BYTES = 4 << 20   # fuse the logit matmul when qn fits comfortably in VMEM


def _round_up(x: int, m: int) -> int:
    return ((x + m - 1) // m) * m


def _pad2d(x, rows, cols):
    r, c = x.shape
    if r == rows and c == cols:
        return x
    return jnp.pad(x, ((0, rows - r), (0, cols - c)))


def _cast(x, dtype):
    return x if x.dtype == jnp.dtype(dtype) else x.astype(dtype)


def _make_resident_mode():
    # Single-buffer grid-invariant operands; fall back gracefully if unsupported.
    try:
        return pl.Buffered(1)
    except Exception:  # pragma: no cover
        return None


_RESIDENT_MODE = _make_resident_mode()


def _resident(block_shape, index_map):
    """BlockSpec for a grid-invariant operand (weights / biases / resident qn)."""
    if _RESIDENT_MODE is None:
        return pl.BlockSpec(block_shape, index_map)
    return pl.BlockSpec(block_shape, index_map, pipeline_mode=_RESIDENT_MODE)


def _pick_row_tile(n, cap):
    """Row tile (multiple of 128, <= cap). Prefers >=2 grid steps (v7x megacore)."""
    n128 = _round_up(max(n, 1), 128)
    t = min(cap, n128)
    if n128 >= 256 and -(-n128 // t) < 2:
        t = _round_up(-(-n128 // 2), 128)
    return t


def _divisor_tile(n_pad, cap):
    """Largest multiple of 128 <= cap that divides n_pad (n_pad is a multiple of 128)."""
    t = max(128, (min(cap, n_pad) // 128) * 128)
    while n_pad % t:
        t -= 128
    return t


# --------------------------- parameter preparation (off hot path) ---------------------------

def prepare_params(params, embed_dim, *, compute_dtype=None):
    """Pad PyTorch-layout Linear weights to lane-dense (d_pad, d_pad) and cast once."""
    cdt = jnp.dtype(compute_dtype) if compute_dtype is not None else jnp.dtype(
        params["query_fc.0.weight"].dtype)
    d_pad = _round_up(embed_dim, 128)
    prepared = {}
    for br in ("query_fc", "sentence_fc"):
        prepared[f"{br}.w1"] = _cast(_pad2d(params[f"{br}.0.weight"], d_pad, d_pad), cdt)
        prepared[f"{br}.w2"] = _cast(_pad2d(params[f"{br}.2.weight"], d_pad, d_pad), cdt)
        prepared[f"{br}.b1"] = _cast(
            _pad2d(params[f"{br}.0.bias"].reshape(1, -1), 1, d_pad), jnp.float32)
        prepared[f"{br}.b2"] = _cast(
            _pad2d(params[f"{br}.2.bias"].reshape(1, -1), 1, d_pad), jnp.float32)
    return prepared


# --------------------- stage 1: Linear -> ReLU -> Linear -> L2 normalize ---------------------

def _project_kernel(x_ref, w1_ref, b1_ref, w2_ref, b2_ref, out_ref, *, eps):
    # PyTorch Linear: y = x @ W.T + b with W stored [out, in]; contract the "in"
    # dim of both operands -- no transpose materialized, MXU native.
    x = x_ref[...]
    h = lax.dot_general(x, w1_ref[...], (((1,), (1,)), ((), ())),
                        preferred_element_type=jnp.float32)
    h = jnp.maximum(h + b1_ref[...], 0.0).astype(x.dtype)
    f = lax.dot_general(h, w2_ref[...], (((1,), (1,)), ((), ())),
                        preferred_element_type=jnp.float32)
    f = f + b2_ref[...]
    inv = lax.rsqrt(jnp.sum(f * f, axis=-1, keepdims=True) + eps)   # EUP
    out_ref[...] = (f * inv).astype(out_ref.dtype)


def _project_normalize(x, w1, b1, w2, b2, *, tile_rows, compute_dtype, eps):
    n = x.shape[0]
    d_pad = w1.shape[0]
    n_pad = _round_up(max(n, tile_rows), tile_rows)
    xp = _cast(_pad2d(x, n_pad, d_pad), compute_dtype)
    ab = jnp.dtype(compute_dtype).itemsize

    vmem = int(
        4 * tile_rows * d_pad * ab        # x + out, double buffered
        + 2 * d_pad * d_pad * ab          # w1, w2 (single buffered, Buffered(1))
        + 2 * d_pad * 4                   # biases
        + 2 * tile_rows * d_pad * 4       # f32 intermediates
        + (4 << 20))                      # headroom
    vmem = min(vmem, _VMEM_CAP)
    cost = pl.CostEstimate(
        flops=int(4 * n_pad * d_pad * d_pad + 4 * n_pad * d_pad),
        transcendentals=int(n_pad),
        bytes_accessed=int(2 * n_pad * d_pad * ab + 2 * d_pad * d_pad * ab + 8 * d_pad))

    return pl.pallas_call(
        functools.partial(_project_kernel, eps=eps),
        out_shape=jax.ShapeDtypeStruct((n_pad, d_pad), compute_dtype),
        grid=(n_pad // tile_rows,),
        in_specs=[
            pl.BlockSpec((tile_rows, d_pad), lambda i: (i, 0)),
            _resident((d_pad, d_pad), lambda i: (0, 0)),
            _resident((1, d_pad), lambda i: (0, 0)),
            _resident((d_pad, d_pad), lambda i: (0, 0)),
            _resident((1, d_pad), lambda i: (0, 0)),
        ],
        out_specs=pl.BlockSpec((tile_rows, d_pad), lambda i: (i, 0)),
        compiler_params=pltpu.CompilerParams(
            dimension_semantics=("parallel",), vmem_limit_bytes=vmem),
        cost_estimate=cost,
    )(xp, w1, b1, w2, b2)


# --------- fused stage: sentence projection + normalize + logits (qn VMEM-resident) ---------

def _fused_sentence_logit_kernel(x_ref, w1_ref, b1_ref, w2_ref, b2_ref, qn_ref,
                                 out_ref, *, eps):
    x = x_ref[...]
    h = lax.dot_general(x, w1_ref[...], (((1,), (1,)), ((), ())),
                        preferred_element_type=jnp.float32)
    h = jnp.maximum(h + b1_ref[...], 0.0).astype(x.dtype)
    f = lax.dot_general(h, w2_ref[...], (((1,), (1,)), ((), ())),
                        preferred_element_type=jnp.float32)
    f = f + b2_ref[...]
    inv = lax.rsqrt(jnp.sum(f * f, axis=-1, keepdims=True) + eps)
    sn = (f * inv).astype(qn_ref.dtype)
    # logits tile = sn @ qn.T, contracting last dims (no transpose materialized).
    out_ref[...] = lax.dot_general(sn, qn_ref[...], (((1,), (1,)), ((), ())),
                                   preferred_element_type=jnp.float32
                                   ).astype(out_ref.dtype)


def _project_normalize_logit(x, w1, b1, w2, b2, qn, *, tile_rows, compute_dtype, eps):
    n = x.shape[0]
    d_pad = w1.shape[0]
    nq_pad = qn.shape[0]
    n_pad = _round_up(max(n, tile_rows), tile_rows)
    xp = _cast(_pad2d(x, n_pad, d_pad), compute_dtype)
    ab = jnp.dtype(compute_dtype).itemsize

    vmem = int(
        2 * tile_rows * d_pad * ab        # x, double buffered
        + 2 * d_pad * d_pad * ab          # weights (single buffered)
        + 2 * d_pad * 4                   # biases
        + nq_pad * d_pad * ab             # resident qn (single buffered)
        + 2 * tile_rows * nq_pad * 4      # f32 logits tile, double buffered
        + 2 * tile_rows * d_pad * 4       # f32 intermediates
        + (4 << 20))
    vmem = min(vmem, _VMEM_CAP)
    cost = pl.CostEstimate(
        flops=int(4 * n_pad * d_pad * d_pad + 2 * n_pad * nq_pad * d_pad
                  + 4 * n_pad * d_pad),
        transcendentals=int(n_pad),
        bytes_accessed=int(n_pad * d_pad * ab + 2 * d_pad * d_pad * ab
                           + nq_pad * d_pad * ab + n_pad * nq_pad * 4))

    return pl.pallas_call(
        functools.partial(_fused_sentence_logit_kernel, eps=eps),
        out_shape=jax.ShapeDtypeStruct((n_pad, nq_pad), jnp.float32),
        grid=(n_pad // tile_rows,),
        in_specs=[
            pl.BlockSpec((tile_rows, d_pad), lambda i: (i, 0)),
            _resident((d_pad, d_pad), lambda i: (0, 0)),
            _resident((1, d_pad), lambda i: (0, 0)),
            _resident((d_pad, d_pad), lambda i: (0, 0)),
            _resident((1, d_pad), lambda i: (0, 0)),
            _resident((nq_pad, d_pad), lambda i: (0, 0)),
        ],
        out_specs=pl.BlockSpec((tile_rows, nq_pad), lambda i: (i, 0)),
        compiler_params=pltpu.CompilerParams(
            dimension_semantics=("parallel",), vmem_limit_bytes=vmem),
        cost_estimate=cost,
    )(xp, w1, b1, w2, b2, qn)


# ------------------- fallback stage 2 (huge Nq): 2-D tiled logits = sn @ qn.T -------------------

def _logit_kernel(s_ref, q_ref, out_ref):
    out_ref[...] = lax.dot_general(
        s_ref[...], q_ref[...], (((1,), (1,)), ((), ())),
        preferred_element_type=jnp.float32).astype(out_ref.dtype)


def _logit_matmul(sn, qn):
    ns_pad, d_pad = sn.shape
    nq_pad, _ = qn.shape
    ab = sn.dtype.itemsize
    tile_s = _divisor_tile(ns_pad, 512)
    tile_q = _divisor_tile(nq_pad, 512)

    vmem = int(2 * tile_s * d_pad * ab + 2 * tile_q * d_pad * ab
               + 2 * tile_s * tile_q * 4 + (4 << 20))
    vmem = min(vmem, _VMEM_CAP)
    cost = pl.CostEstimate(
        flops=int(2 * ns_pad * nq_pad * d_pad),
        transcendentals=0,
        bytes_accessed=int(2 * (ns_pad + nq_pad) * d_pad * ab + ns_pad * nq_pad * 4))

    return pl.pallas_call(
        _logit_kernel,
        out_shape=jax.ShapeDtypeStruct((ns_pad, nq_pad), jnp.float32),
        grid=(ns_pad // tile_s, nq_pad // tile_q),
        in_specs=[
            pl.BlockSpec((tile_s, d_pad), lambda i, j: (i, 0)),
            pl.BlockSpec((tile_q, d_pad), lambda i, j: (j, 0)),
        ],
        out_specs=pl.BlockSpec((tile_s, tile_q), lambda i, j: (i, j)),
        compiler_params=pltpu.CompilerParams(
            dimension_semantics=("parallel", "parallel"), vmem_limit_bytes=vmem),
        cost_estimate=cost,
    )(sn, qn)


# --------------------------------------- wrapper ---------------------------------------

def sentence_text_logit_forward(query_cls_emb, sentence_cls_features, params,
                                *, compute_dtype=None, eps=1e-12):
    """query_cls_emb: [Nq, D], sentence_cls_features: [Ns, D] -> logits [Ns, Nq].

    `params` is either raw PyTorch-layout weights ("query_fc.0.weight", ...) or a
    dict from `prepare_params` (preferred: pads/casts the weights once, off the
    hot path).  Use compute_dtype=jnp.bfloat16 for bf16 MXU with f32 accumulation
    (recommended on v6e/v7x).
    """
    nq, d = query_cls_emb.shape
    ns, d2 = sentence_cls_features.shape
    assert d == d2

    if "query_fc.w1" not in params:
        params = prepare_params(params, d, compute_dtype=compute_dtype)
    cdt = params["query_fc.w1"].dtype
    d_pad = params["query_fc.w1"].shape[0]
    ab = jnp.dtype(cdt).itemsize

    # Stage 1 (query branch): large row tiles, decoupled from output tiling.
    tile_q_rows = _pick_row_tile(nq, 1024)
    qn = _project_normalize(
        query_cls_emb,
        params["query_fc.w1"], params["query_fc.b1"],
        params["query_fc.w2"], params["query_fc.b2"],
        tile_rows=tile_q_rows, compute_dtype=cdt, eps=eps)
    nq_pad = qn.shape[0]

    if nq_pad * d_pad * ab <= _QN_RESIDENT_BYTES:
        # Fused sentence projection + logits: qn stays VMEM-resident and is read
        # from HBM exactly once; sn never round-trips through HBM.
        cap = max(128, min(1024, ((4 << 20) // (nq_pad * 4)) // 128 * 128))
        tile_s_rows = _pick_row_tile(ns, cap)
        logits_pad = _project_normalize_logit(
            sentence_cls_features,
            params["sentence_fc.w1"], params["sentence_fc.b1"],
            params["sentence_fc.w2"], params["sentence_fc.b2"],
            qn, tile_rows=tile_s_rows, compute_dtype=cdt, eps=eps)
    else:
        # Huge-Nq fallback: separate sentence projection + 2-D tiled logit matmul.
        tile_s_rows = _pick_row_tile(ns, 1024)
        sn = _project_normalize(
            sentence_cls_features,
            params["sentence_fc.w1"], params["sentence_fc.b1"],
            params["sentence_fc.w2"], params["sentence_fc.b2"],
            tile_rows=tile_s_rows, compute_dtype=cdt, eps=eps)
        logits_pad = _logit_matmul(sn, qn)

    return logits_pad[:ns, :nq]


# -------------------------------------- test helpers --------------------------------------

def init_params(key, embed_dim):
    """Deterministic init matching module.init_weights: N(0, 0.02) weights, zero bias."""
    ks = jax.random.split(key, 4)
    std = 0.02
    return {
        "query_fc.0.weight": std * jax.random.normal(ks[0], (embed_dim, embed_dim), jnp.float32),
        "query_fc.0.bias": jnp.zeros((embed_dim,), jnp.float32),
        "query_fc.2.weight": std * jax.random.normal(ks[1], (embed_dim, embed_dim), jnp.float32),
        "query_fc.2.bias": jnp.zeros((embed_dim,), jnp.float32),
        "sentence_fc.0.weight": std * jax.random.normal(ks[2], (embed_dim, embed_dim), jnp.float32),
        "sentence_fc.0.bias": jnp.zeros((embed_dim,), jnp.float32),
        "sentence_fc.2.weight": std * jax.random.normal(ks[3], (embed_dim, embed_dim), jnp.float32),
        "sentence_fc.2.bias": jnp.zeros((embed_dim,), jnp.float32),
    }


def _reference(query_cls_emb, sentence_cls_features, params):
    """Pure-JAX reference matching the PyTorch module."""
    def mlp(x, prefix):
        h = x @ params[f"{prefix}.0.weight"].T + params[f"{prefix}.0.bias"]
        h = jnp.maximum(h, 0.0)
        return h @ params[f"{prefix}.2.weight"].T + params[f"{prefix}.2.bias"]

    q = mlp(query_cls_emb, "query_fc")
    s = mlp(sentence_cls_features, "sentence_fc")
    q = q / jnp.linalg.norm(q, axis=-1, keepdims=True)
    s = s / jnp.linalg.norm(s, axis=-1, keepdims=True)
    return s @ q.T


if __name__ == "__main__":
    key = jax.random.PRNGKey(0)
    k_q, k_s, k_p = jax.random.split(key, 3)

    embed_dim = 32     # small synthetic hidden size (module default is 512)
    n_query = 8
    n_sentence = 8

    query_cls_emb = jax.random.normal(k_q, (n_query, embed_dim), jnp.float32)
    sentence_cls_features = jax.random.normal(k_s, (n_sentence, embed_dim), jnp.float32)
    params = init_params(k_p, embed_dim)

    ref = _reference(query_cls_emb, sentence_cls_features, params)

    # f32 path (numerical parity with the PyTorch module), fused qn-resident stage 2.
    logits = jax.block_until_ready(
        sentence_text_logit_forward(query_cls_emb, sentence_cls_features, params))
    assert logits.shape == (n_sentence, n_query)
    assert jnp.allclose(logits, ref, atol=1e-5, rtol=1e-5)

    # bf16 MXU path with f32 accumulation; weights pre-cast once off the hot path.
    pp_bf16 = prepare_params(params, embed_dim, compute_dtype=jnp.bfloat16)
    logits_bf16 = jax.block_until_ready(
        sentence_text_logit_forward(query_cls_emb, sentence_cls_features, pp_bf16))
    assert logits_bf16.shape == (n_sentence, n_query)
    assert jnp.allclose(logits_bf16, ref, atol=5e-2, rtol=5e-2)

    # Also exercise the non-fused fallback path (huge-Nq regime) on the same data.
    pp_f32 = prepare_params(params, embed_dim)
    qn_fb = _project_normalize(query_cls_emb,
                               pp_f32["query_fc.w1"], pp_f32["query_fc.b1"],
                               pp_f32["query_fc.w2"], pp_f32["query_fc.b2"],
                               tile_rows=128, compute_dtype=jnp.float32, eps=1e-12)
    sn_fb = _project_normalize(sentence_cls_features,
                               pp_f32["sentence_fc.w1"], pp_f32["sentence_fc.b1"],
                               pp_f32["sentence_fc.w2"], pp_f32["sentence_fc.b2"],
                               tile_rows=128, compute_dtype=jnp.float32, eps=1e-12)
    logits_fb = jax.block_until_ready(
        _logit_matmul(sn_fb, qn_fb)[:n_sentence, :n_query])
    assert jnp.allclose(logits_fb, ref, atol=1e-5, rtol=1e-5)

    print("KERNEL_OK")
</pallas_src>

<mosaic_0001>
module attributes {stable_mosaic.version = 11 : i64} {
  func.func @_project_kernel(%arg0: i32, %arg1: memref<128x128xf32, #tpu.memory_space<vmem>>, %arg2: memref<128x128xf32, #tpu.memory_space<vmem>>, %arg3: memref<1x128xf32, #tpu.memory_space<vmem>>, %arg4: memref<128x128xf32, #tpu.memory_space<vmem>>, %arg5: memref<1x128xf32, #tpu.memory_space<vmem>>, %arg6: memref<128x128xf32, #tpu.memory_space<vmem>>) attributes {dimension_semantics = [#tpu.dimension_semantics<parallel>], iteration_bounds = array<i64: 1>, scalar_prefetch = 0 : i64, scratch_operands = 0 : i64, tpu.core_type = #tpu.core_type<tc>, window_params = [{transform_indices = @transform_0, window_bounds = array<i64: 128, 128>}, {pipeline_mode = #tpu.pipeline_mode<synchronous>, transform_indices = @transform_1, window_bounds = array<i64: 128, 128>}, {pipeline_mode = #tpu.pipeline_mode<synchronous>, transform_indices = @transform_2, window_bounds = array<i64: 1, 128>}, {pipeline_mode = #tpu.pipeline_mode<synchronous>, transform_indices = @transform_3, window_bounds = array<i64: 128, 128>}, {pipeline_mode = #tpu.pipeline_mode<synchronous>, transform_indices = @transform_4, window_bounds = array<i64: 1, 128>}, {transform_indices = @transform_5, window_bounds = array<i64: 128, 128>}]} {
    %c0 = arith.constant 0 : index
    %c0_0 = arith.constant 0 : index
    %0 = vector.load %arg1[%c0, %c0_0] : memref<128x128xf32, #tpu.memory_space<vmem>>, vector<128x128xf32>
    %c0_1 = arith.constant 0 : index
    %c0_2 = arith.constant 0 : index
    %1 = vector.load %arg2[%c0_1, %c0_2] : memref<128x128xf32, #tpu.memory_space<vmem>>, vector<128x128xf32>
    %cst = arith.constant dense<0.000000e+00> : vector<128x128xf32>
    %2 = tpu.matmul %0, %1, %cst {dimension_numbers = #tpu.dot_dimension_numbers<[1], [1], [0], [0], [0, 0, 1, 0], [], []>} : vector<128x128xf32>, vector<128x128xf32>, vector<128x128xf32> -> vector<128x128xf32>
    %c0_3 = arith.constant 0 : index
    %c0_4 = arith.constant 0 : index
    %3 = vector.load %arg3[%c0_3, %c0_4] : memref<1x128xf32, #tpu.memory_space<vmem>>, vector<1x128xf32>
    %4 = vector.broadcast %3 : vector<1x128xf32> to vector<128x128xf32>
    %5 = arith.addf %2, %4 : vector<128x128xf32>
    %cst_5 = arith.constant 0.000000e+00 : f32
    %6 = vector.broadcast %cst_5 : f32 to vector<128x128xf32>
    %7 = arith.maximumf %5, %6 : vector<128x128xf32>
    %c0_6 = arith.constant 0 : index
    %c0_7 = arith.constant 0 : index
    %8 = vector.load %arg4[%c0_6, %c0_7] : memref<128x128xf32, #tpu.memory_space<vmem>>, vector<128x128xf32>
    %cst_8 = arith.constant dense<0.000000e+00> : vector<128x128xf32>
    %9 = tpu.matmul %7, %8, %cst_8 {dimension_numbers = #tpu.dot_dimension_numbers<[1], [1], [0], [0], [0, 0, 1, 0], [], []>} : vector<128x128xf32>, vector<128x128xf32>, vector<128x128xf32> -> vector<128x128xf32>
    %c0_9 = arith.constant 0 : index
    %c0_10 = arith.constant 0 : index
    %10 = vector.load %arg5[%c0_9, %c0_10] : memref<1x128xf32, #tpu.memory_space<vmem>>, vector<1x128xf32>
    %11 = vector.broadcast %10 : vector<1x128xf32> to vector<128x128xf32>
    %12 = arith.addf %9, %11 : vector<128x128xf32>
    %13 = arith.mulf %12, %12 : vector<128x128xf32>
    %cst_11 = arith.constant dense<0.000000e+00> : vector<128xf32>
    %14 = vector.multi_reduction <add>, %13, %cst_11 [1] : vector<128x128xf32> to vector<128xf32>
    %15 = vector.shape_cast %14 : vector<128xf32> to vector<128x1xf32>
    %cst_12 = arith.constant 9.99999996E-13 : f32
    %16 = vector.broadcast %cst_12 : f32 to vector<128x1xf32>
    %17 = arith.addf %15, %16 : vector<128x1xf32>
    %18 = math.rsqrt %17 : vector<128x1xf32>
    %19 = vector.broadcast %18 : vector<128x1xf32> to vector<128x128xf32>
    %20 = arith.mulf %12, %19 : vector<128x128xf32>
    %c0_13 = arith.constant 0 : index
    %c0_14 = arith.constant 0 : index
    %21 = vector.load %arg6[%c0_13, %c0_14] : memref<128x128xf32, #tpu.memory_space<vmem>>, vector<128x128xf32>
    tpu.vector_store %arg6[%c0_13, %c0_14], %20 {strides = array<i32>} : memref<128x128xf32, #tpu.memory_space<vmem>>, vector<128x128xf32>,
    return
  }
  func.func @transform_0(%arg0: i32) -> (i32, i32) {
    %c0_i32 = arith.constant 0 : i32
    %c0_i32_0 = arith.constant 0 : i32
    return %arg0, %c0_i32 : i32, i32
  }
  func.func @transform_1(%arg0: i32) -> (i32, i32) {
    %c0_i32 = arith.constant 0 : i32
    %c0_i32_0 = arith.constant 0 : i32
    %c0_i32_1 = arith.constant 0 : i32
    return %c0_i32, %c0_i32_0 : i32, i32
  }
  func.func @transform_2(%arg0: i32) -> (i32, i32) {
    %c0_i32 = arith.constant 0 : i32
    %c0_i32_0 = arith.constant 0 : i32
    %c0_i32_1 = arith.constant 0 : i32
    return %c0_i32, %c0_i32_0 : i32, i32
  }
  func.func @transform_3(%arg0: i32) -> (i32, i32) {
    %c0_i32 = arith.constant 0 : i32
    %c0_i32_0 = arith.constant 0 : i32
    %c0_i32_1 = arith.constant 0 : i32
    return %c0_i32, %c0_i32_0 : i32, i32
  }
  func.func @transform_4(%arg0: i32) -> (i32, i32) {
    %c0_i32 = arith.constant 0 : i32
    %c0_i32_0 = arith.constant 0 : i32
    %c0_i32_1 = arith.constant 0 : i32
    return %c0_i32, %c0_i32_0 : i32, i32
  }
  func.func @transform_5(%arg0: i32) -> (i32, i32) {
    %c0_i32 = arith.constant 0 : i32
    %c0_i32_0 = arith.constant 0 : i32
    return %arg0, %c0_i32 : i32, i32
  }
}

</mosaic_0001>

<llo_original>
// kernel: tpu_custom_call.1
$region0: #{tpu_custom_call.1}
  #allocation0 [shape = 'u32[]', space=smem, size = 0x4, offset = 0x4, fixed_abs, tag = 'smem constant byte address 0x4 - core index']
  #allocation1 [shape = 'u32[144,128]{1,0:T(1,128)}', space=vmem, size = 0x12000, scoped, tag = 'internal scratch']
  %s0 = inlined_call_operand.hbm [shape: f32[128,128], index: 0, kind: input, shape index: {}]
  %s1 = inlined_call_operand.hbm [shape: f32[128,128], index: 1, kind: input, shape index: {}]
  %s2 = inlined_call_operand.vmem [shape: f32[1,128], index: 2, kind: input, shape index: {}]
  %s3 = inlined_call_operand.hbm [shape: f32[128,128], index: 3, kind: input, shape index: {}]
  %s4 = inlined_call_operand.vmem [shape: f32[1,128], index: 4, kind: input, shape index: {}]
  %s5 = inlined_call_operand.hbm [shape: f32[128,128], index: 5, kind: output, shape index: {}]
  %s6 = sld [smem:[#allocation0]]
  $region42: #{tpu_custom_call.1} parent=0
    _
  %s8 = ssub.s32 1, %s6
  %s9 = scalar_select 0, %s8, %s6
  $region1: #{tpu_custom_call.1} parent=0
    #allocation2 [shape = 'u8[65536]{0}', space=vmem, size = 0x10000, scoped, tag = 'input window, operand 0, single buffered']
    #allocation3 [shape = 's32[1]{0}', space=sflag, size = 0x4, scoped, tag = 'scoped memory for tpu_custom_call.1']
    #allocation4 [shape = 's32[1]{0}', space=sflag, size = 0x4, scoped, tag = 'scoped memory for tpu_custom_call.1']
    #allocation5 [shape = 'u8[65536]{0}', space=vmem, size = 0x10000, scoped, tag = 'input window, operand 1, single buffered']
    #allocation6 [shape = 's32[1]{0}', space=sflag, size = 0x4, scoped, tag = 'scoped memory for tpu_custom_call.1']
    #allocation7 [shape = 'u8[65536]{0}', space=vmem, size = 0x10000, scoped, tag = 'input window, operand 3, single buffered']
    #allocation8 [shape = 'u8[65536]{0}', space=vmem, size = 0x10000, scoped, tag = 'output window, operand 0, single buffered']
    %10 = vsyncpa [#allocation3], 0
    %11 = vsyncpa [#allocation6], 0
    %12 = vsyncpa [#allocation4], 0
    // Predicated region
    $region2: #{tpu_custom_call.1} parent=1 // pred_check
      _
    $region3: #{tpu_custom_call.1} parent=1 // pred_check_branch
      %14 = sbr.rel (0) target = $region5
    $region4: #{tpu_custom_call.1} parent=1 // pred_region
      %s16 = ssub.s32 2048, 2048
      %17 = vsyncadd [#allocation3], %s16
      %s18 = sshll.u32 [#allocation2], 4
      %s19 = int_to_ptr.vmem [resolvable:$true] %s18
      %24 = dma.hbm_to_vmem [thread:$0]  %s0, 2048, %s19, [#allocation3], 128, 128, 8
    $region5: #{tpu_custom_call.1} parent=1 // pred_fallthru
      _
    // Predicated region
    $region6: #{tpu_custom_call.1} parent=1 // pred_check
      _
    $region7: #{tpu_custom_call.1} parent=1 // pred_check_branch
      %26 = sbr.rel (0) target = $region9
    $region8: #{tpu_custom_call.1} parent=1 // pred_region
      %s28 = ssub.s32 2048, 2048
      %29 = vsyncadd [#allocation6], %s28
      %s30 = sshll.u32 [#allocation5], 4
      %s31 = int_to_ptr.vmem [resolvable:$true] %s30
      %36 = dma.hbm_to_vmem [thread:$0]  %s1, 2048, %s31, [#allocation6], 128, 128, 8
    $region9: #{tpu_custom_call.1} parent=1 // pred_fallthru
      _
    // Predicated region
    $region10: #{tpu_custom_call.1} parent=1 // pred_check
      _
    $region11: #{tpu_custom_call.1} parent=1 // pred_check_branch
      %38 = sbr.rel (0) target = $region13
    $region12: #{tpu_custom_call.1} parent=1 // pred_region
      _
    $region13: #{tpu_custom_call.1} parent=1 // pred_fallthru
      _
    // Predicated region
    $region14: #{tpu_custom_call.1} parent=1 // pred_check
      _
    $region15: #{tpu_custom_call.1} parent=1 // pred_check_branch
      %40 = sbr.rel (0) target = $region17
    $region16: #{tpu_custom_call.1} parent=1 // pred_region
      %s42 = ssub.s32 2048, 2048
      %43 = vsyncadd [#allocation6], %s42
      %s44 = sshll.u32 [#allocation7], 4
      %s45 = int_to_ptr.vmem [resolvable:$true] %s44
      %50 = dma.hbm_to_vmem [thread:$0]  %s3, 2048, %s45, [#allocation6], 128, 128, 8
    $region17: #{tpu_custom_call.1} parent=1 // pred_fallthru
      _
    // Predicated region
    $region18: #{tpu_custom_call.1} parent=1 // pred_check
      _
    $region19: #{tpu_custom_call.1} parent=1 // pred_check_branch
      %52 = sbr.rel (0) target = $region21
    $region20: #{tpu_custom_call.1} parent=1 // pred_region
      _
    $region21: #{tpu_custom_call.1} parent=1 // pred_fallthru
      _
    // Predicated region
    $region22: #{tpu_custom_call.1} parent=1 // pred_check
      _
    $region23: #{tpu_custom_call.1} parent=1 // pred_check_branch
      %54 = sbr.rel (0) target = $region25
    $region24: #{tpu_custom_call.1} parent=1 // pred_region
      %55 = dma.done [#allocation3], 2048
    $region25: #{tpu_custom_call.1} parent=1 // pred_fallthru
      _
    // Predicated region
    $region26: #{tpu_custom_call.1} parent=1 // pred_check
      _
    $region27: #{tpu_custom_call.1} parent=1 // pred_check_branch
      %57 = sbr.rel (0) target = $region29
    $region28: #{tpu_custom_call.1} parent=1 // pred_region
      %58 = dma.done [#allocation6], 2048
    $region29: #{tpu_custom_call.1} parent=1 // pred_fallthru
      _
    // Predicated region
    $region30: #{tpu_custom_call.1} parent=1 // pred_check
      _
    $region31: #{tpu_custom_call.1} parent=1 // pred_check_branch
      %60 = sbr.rel (0) target = $region33
    $region32: #{tpu_custom_call.1} parent=1 // pred_region
      %61 = dma.done [#allocation6], 2048
    $region33: #{tpu_custom_call.1} parent=1 // pred_fallthru
      _
    %v62 = vld [vmem:[#allocation2] sm:$0xff]
    %v63 = vld [vmem:[#allocation2 + $0x8] sm:$0xff]
    %v64 = vld [vmem:[#allocation2 + $0x10] sm:$0xff]
    %v65 = vld [vmem:[#allocation2 + $0x18] sm:$0xff]
    %v66 = vld [vmem:[#allocation2 + $0x20] sm:$0xff]
    %v67 = vld [vmem:[#allocation2 + $0x28] sm:$0xff]
    %v68 = vld [vmem:[#allocation2 + $0x30] sm:$0xff]
    %v69 = vld [vmem:[#allocation2 + $0x38] sm:$0xff]
    %v70 = vld [vmem:[#allocation2 + $0x40] sm:$0xff]
    %v71 = vld [vmem:[#allocation2 + $0x48] sm:$0xff]
    %v72 = vld [vmem:[#allocation2 + $0x50] sm:$0xff]
    %v73 = vld [vmem:[#allocation2 + $0x58] sm:$0xff]
    %v74 = vld [vmem:[#allocation2 + $0x60] sm:$0xff]
    %v75 = vld [vmem:[#allocation2 + $0x68] sm:$0xff]
    %v76 = vld [vmem:[#allocation2 + $0x70] sm:$0xff]
    %v77 = vld [vmem:[#allocation2 + $0x78] sm:$0xff]
    %v78 = vld [vmem:[#allocation5] sm:$0xff]
    %v79 = vld [vmem:[#allocation5 + $0x8] sm:$0xff]
    %v80 = vld [vmem:[#allocation5 + $0x10] sm:$0xff]
    %v81 = vld [vmem:[#allocation5 + $0x18] sm:$0xff]
    %v82 = vld [vmem:[#allocation5 + $0x20] sm:$0xff]
    %v83 = vld [vmem:[#allocation5 + $0x28] sm:$0xff]
    %v84 = vld [vmem:[#allocation5 + $0x30] sm:$0xff]
    %v85 = vld [vmem:[#allocation5 + $0x38] sm:$0xff]
    %v86 = vld [vmem:[#allocation5 + $0x40] sm:$0xff]
    %v87 = vld [vmem:[#allocation5 + $0x48] sm:$0xff]
    %v88 = vld [vmem:[#allocation5 + $0x50] sm:$0xff]
    %v89 = vld [vmem:[#allocation5 + $0x58] sm:$0xff]
    %v90 = vld [vmem:[#allocation5 + $0x60] sm:$0xff]
    %v91 = vld [vmem:[#allocation5 + $0x68] sm:$0xff]
    %v92 = vld [vmem:[#allocation5 + $0x70] sm:$0xff]
    %v93 = vld [vmem:[#allocation5 + $0x78] sm:$0xff]
    %v94 = vld [vmem:[%s2] sm:$0x1]
    %v96 = vlaneseq
    %v97 = vshrl.u32 %v96, 7
    %v98 = vsub.s32 0, %v97
    %v99 = vrot.slane %v94, %v98
    %101 = vmatprep.subr.mxu0 0.0
    %102 = vmatpush1.xpose.msra.mxu0 %v78
    %103 = vmatprep.subr.mxu0 0.0
    %104 = vmatpush1.xpose.msra.mxu0 %v79
    %105 = vmatprep.subr.mxu0 0.0
    %106 = vmatpush1.xpose.msra.mxu0 %v80
    %107 = vmatprep.subr.mxu0 0.0
    %108 = vmatpush1.xpose.msra.mxu0 %v81
    %109 = vmatprep.subr.mxu0 0.0
    %110 = vmatpush1.xpose.msra.mxu0 %v82
    %111 = vmatprep.subr.mxu0 0.0
    %112 = vmatpush1.xpose.msra.mxu0 %v83
    %113 = vmatprep.subr.mxu0 0.0
    %114 = vmatpush1.xpose.msra.mxu0 %v84
    %115 = vmatprep.subr.mxu0 0.0
    %116 = vmatpush1.xpose.msra.mxu0 %v85
    %117 = vmatprep.subr.mxu0 0.0
    %118 = vmatpush1.xpose.msra.mxu0 %v86
    %119 = vmatprep.subr.mxu0 0.0
    %120 = vmatpush1.xpose.msra.mxu0 %v87
    %121 = vmatprep.subr.mxu0 0.0
    %122 = vmatpush1.xpose.msra.mxu0 %v88
    %123 = vmatprep.subr.mxu0 0.0
    %124 = vmatpush1.xpose.msra.mxu0 %v89
    %125 = vmatprep.subr.mxu0 0.0
    %126 = vmatpush1.xpose.msra.mxu0 %v90
    %127 = vmatprep.subr.mxu0 0.0
    %128 = vmatpush1.xpose.msra.mxu0 %v91
    %129 = vmatprep.subr.mxu0 0.0
    %130 = vmatpush1.xpose.msra.mxu0 %v92
    %131 = vmatprep.subr.mxu0 0.0
    %132 = vmatpush1.xpose.msra.mxu0 %v93
    %133 = vmatprep.subr.mxu0 0.0
    %134 = vmatpush1.xpose.msra.mxu0 0.0
    %135 = vmatprep.subr.mxu0 0.0
    %136 = vmatpush1.xpose.msra.mxu0 0.0
    %137 = vmatprep.subr.mxu0 0.0
    %138 = vmatpush1.xpose.msra.mxu0 0.0
    %139 = vmatprep.subr.mxu0 0.0
    %140 = vmatpush1.xpose.msra.mxu0 0.0
    %141 = vmatprep.subr.mxu0 0.0
    %142 = vmatpush1.xpose.msra.mxu0 0.0
    %143 = vmatprep.subr.mxu0 0.0
    %144 = vmatpush1.xpose.msra.mxu0 0.0
    %145 = vmatprep.subr.mxu0 0.0
    %146 = vmatpush1.xpose.msra.mxu0 0.0
    %147 = vmatprep.subr.mxu0 0.0
    %148 = vmatpush1.xpose.msra.mxu0 0.0
    %149 = vmatprep.subr.mxu0 0.0
    %150 = vmatpush1.xpose.msra.mxu0 0.0
    %151 = vmatprep.subr.mxu0 0.0
    %152 = vmatpush1.xpose.msra.mxu0 0.0
    %153 = vmatprep.subr.mxu0 0.0
    %154 = vmatpush1.xpose.msra.mxu0 0.0
    %155 = vmatprep.subr.mxu0 0.0
    %156 = vmatpush1.xpose.msra.mxu0 0.0
    %157 = vmatprep.subr.mxu0 0.0
    %158 = vmatpush1.xpose.msra.mxu0 0.0
    %159 = vmatprep.subr.mxu0 0.0
    %160 = vmatpush1.xpose.msra.mxu0 0.0
    %161 = vmatprep.subr.mxu0 0.0
    %162 = vmatpush1.xpose.msra.mxu0 0.0
    %163 = vmatprep.subr.mxu0 0.0
    %164 = vmatpush1.xpose.msra.mxu0 0.0
    %165 = vmatprep.mubr.f32.mxu0 0.0
    %166 = vmatmul.mubr.f32.gmra.mrb[0].mxu0 %v62
    %v167 = vpop.f32.mrb[0].mxu0
    %v168 = vadd.f32 %v99, %v167
    %v169 = vpop.f32.mrb[0].mxu0
    %170 = vmatprep.mubr.f32.mxu0 0.0
    %171 = vmatmul.mubr.f32.gmra.mrb[0].mxu0 %v63
    %v172 = vpop.f32.mrb[0].mxu0
    %v173 = vadd.f32 %v99, %v172
    %v174 = vpop.f32.mrb[0].mxu0
    %175 = vmatprep.mubr.f32.mxu0 0.0
    %176 = vmatmul.mubr.f32.gmra.mrb[0].mxu0 %v64
    %v177 = vpop.f32.mrb[0].mxu0
    %v178 = vadd.f32 %v99, %v177
    %v179 = vpop.f32.mrb[0].mxu0
    %180 = vmatprep.mubr.f32.mxu0 0.0
    %181 = vmatmul.mubr.f32.gmra.mrb[0].mxu0 %v65
    %v182 = vpop.f32.mrb[0].mxu0
    %v183 = vadd.f32 %v99, %v182
    %v184 = vpop.f32.mrb[0].mxu0
    %185 = vmatprep.mubr.f32.mxu0 0.0
    %186 = vmatmul.mubr.f32.gmra.mrb[0].mxu0 %v66
    %v187 = vpop.f32.mrb[0].mxu0
    %v188 = vadd.f32 %v99, %v187
    %v189 = vpop.f32.mrb[0].mxu0
    %190 = vmatprep.mubr.f32.mxu0 0.0
    %191 = vmatmul.mubr.f32.gmra.mrb[0].mxu0 %v67
    %v192 = vpop.f32.mrb[0].mxu0
    %v193 = vadd.f32 %v99, %v192
    %v194 = vpop.f32.mrb[0].mxu0
    %195 = vmatprep.mubr.f32.mxu0 0.0
    %196 = vmatmul.mubr.f32.gmra.mrb[0].mxu0 %v68
    %v197 = vpop.f32.mrb[0].mxu0
    %v198 = vadd.f32 %v99, %v197
    %v199 = vpop.f32.mrb[0].mxu0
    %200 = vmatprep.mubr.f32.mxu0 0.0
    %201 = vmatmul.mubr.f32.gmra.mrb[0].mxu0 %v69
    %v202 = vpop.f32.mrb[0].mxu0
    %v203 = vadd.f32 %v99, %v202
    %v204 = vpop.f32.mrb[0].mxu0
    %205 = vmatprep.mubr.f32.mxu0 0.0
    %206 = vmatmul.mubr.f32.gmra.mrb[0].mxu0 %v70
    %v207 = vpop.f32.mrb[0].mxu0
    %v208 = vadd.f32 %v99, %v207
    %v209 = vpop.f32.mrb[0].mxu0
    %210 = vmatprep.mubr.f32.mxu0 0.0
    %211 = vmatmul.mubr.f32.gmra.mrb[0].mxu0 %v71
    %v212 = vpop.f32.mrb[0].mxu0
    %v213 = vadd.f32 %v99, %v212
    %v214 = vpop.f32.mrb[0].mxu0
    %215 = vmatprep.mubr.f32.mxu0 0.0
    %216 = vmatmul.mubr.f32.gmra.mrb[0].mxu0 %v72
    %v217 = vpop.f32.mrb[0].mxu0
    %v218 = vadd.f32 %v99, %v217
    %v219 = vpop.f32.mrb[0].mxu0
    %220 = vmatprep.mubr.f32.mxu0 0.0
    %221 = vmatmul.mubr.f32.gmra.mrb[0].mxu0 %v73
    %v222 = vpop.f32.mrb[0].mxu0
    %v223 = vadd.f32 %v99, %v222
    %v224 = vpop.f32.mrb[0].mxu0
    %225 = vmatprep.mubr.f32.mxu0 0.0
    %226 = vmatmul.mubr.f32.gmra.mrb[0].mxu0 %v74
    %v227 = vpop.f32.mrb[0].mxu0
    %v228 = vadd.f32 %v99, %v227
    %v229 = vpop.f32.mrb[0].mxu0
    %230 = vmatprep.mubr.f32.mxu0 0.0
    %231 = vmatmul.mubr.f32.gmra.mrb[0].mxu0 %v75
    %v232 = vpop.f32.mrb[0].mxu0
    %v233 = vadd.f32 %v99, %v232
    %v234 = vpop.f32.mrb[0].mxu0
    %235 = vmatprep.mubr.f32.mxu0 0.0
    %236 = vmatmul.mubr.f32.gmra.mrb[0].mxu0 %v76
    %v237 = vpop.f32.mrb[0].mxu0
    %v238 = vadd.f32 %v99, %v237
    %v239 = vpop.f32.mrb[0].mxu0
    %240 = vmatprep.mubr.f32.mxu0 0.0
    %241 = vmatmul.mubr.f32.gmra.mrb[0].mxu0 %v77
    %v242 = vpop.f32.mrb[0].mxu0
    %v243 = vadd.f32 %v99, %v242
    %v244 = vpop.f32.mrb[0].mxu0
    %245 = vdwg.mxu0
    %v246 = vmax.f32 %v168, 0.0
    %v247 = vmax.f32 %v173, 0.0
    %v248 = vmax.f32 %v178, 0.0
    %v249 = vmax.f32 %v183, 0.0
    %v250 = vmax.f32 %v188, 0.0
    %v251 = vmax.f32 %v193, 0.0
    %v252 = vmax.f32 %v198, 0.0
    %v253 = vmax.f32 %v203, 0.0
    %v254 = vmax.f32 %v208, 0.0
    %v255 = vmax.f32 %v213, 0.0
    %v256 = vmax.f32 %v218, 0.0
    %v257 = vmax.f32 %v223, 0.0
    %v258 = vmax.f32 %v228, 0.0
    %v259 = vmax.f32 %v233, 0.0
    %v260 = vmax.f32 %v238, 0.0
    %v261 = vmax.f32 %v243, 0.0
    %v262 = vld [vmem:[#allocation7] sm:$0xff]
    %v263 = vld [vmem:[#allocation7 + $0x8] sm:$0xff]
    %v264 = vld [vmem:[#allocation7 + $0x10] sm:$0xff]
    %v265 = vld [vmem:[#allocation7 + $0x18] sm:$0xff]
    %v266 = vld [vmem:[#allocation7 + $0x20] sm:$0xff]
    %v267 = vld [vmem:[#allocation7 + $0x28] sm:$0xff]
    %v268 = vld [vmem:[#allocation7 + $0x30] sm:$0xff]
    %v269 = vld [vmem:[#allocation7 + $0x38] sm:$0xff]
    %v270 = vld [vmem:[#allocation7 + $0x40] sm:$0xff]
    %v271 = vld [vmem:[#allocation7 + $0x48] sm:$0xff]
    %v272 = vld [vmem:[#allocation7 + $0x50] sm:$0xff]
    %v273 = vld [vmem:[#allocation7 + $0x58] sm:$0xff]
    %v274 = vld [vmem:[#allocation7 + $0x60] sm:$0xff]
    %v275 = vld [vmem:[#allocation7 + $0x68] sm:$0xff]
    %v276 = vld [vmem:[#allocation7 + $0x70] sm:$0xff]
    %v277 = vld [vmem:[#allocation7 + $0x78] sm:$0xff]
    %v278 = vld [vmem:[%s4] sm:$0x1]
    %v280 = vlaneseq
    %v281 = vshrl.u32 %v280, 7
    %v282 = vsub.s32 0, %v281
    %v283 = vrot.slane %v278, %v282
    %285 = vmatprep.subr.mxu0 0.0
    %286 = vmatpush1.xpose.msra.mxu0 %v262
    %287 = vmatprep.subr.mxu0 0.0
    %288 = vmatpush1.xpose.msra.mxu0 %v263
    %289 = vmatprep.subr.mxu0 0.0
    %290 = vmatpush1.xpose.msra.mxu0 %v264
    %291 = vmatprep.subr.mxu0 0.0
    %292 = vmatpush1.xpose.msra.mxu0 %v265
    %293 = vmatprep.subr.mxu0 0.0
    %294 = vmatpush1.xpose.msra.mxu0 %v266
    %295 = vmatprep.subr.mxu0 0.0
    %296 = vmatpush1.xpose.msra.mxu0 %v267
    %297 = vmatprep.subr.mxu0 0.0
    %298 = vmatpush1.xpose.msra.mxu0 %v268
    %299 = vmatprep.subr.mxu0 0.0
    %300 = vmatpush1.xpose.msra.mxu0 %v269
    %301 = vmatprep.subr.mxu0 0.0
    %302 = vmatpush1.xpose.msra.mxu0 %v270
    %303 = vmatprep.subr.mxu0 0.0
    %304 = vmatpush1.xpose.msra.mxu0 %v271
    %305 = vmatprep.subr.mxu0 0.0
    %306 = vmatpush1.xpose.msra.mxu0 %v272
    %307 = vmatprep.subr.mxu0 0.0
    %308 = vmatpush1.xpose.msra.mxu0 %v273
    %309 = vmatprep.subr.mxu0 0.0
    %310 = vmatpush1.xpose.msra.mxu0 %v274
    %311 = vmatprep.subr.mxu0 0.0
    %312 = vmatpush1.xpose.msra.mxu0 %v275
    %313 = vmatprep.subr.mxu0 0.0
    %314 = vmatpush1.xpose.msra.mxu0 %v276
    %315 = vmatprep.subr.mxu0 0.0
    %316 = vmatpush1.xpose.msra.mxu0 %v277
    %317 = vmatprep.subr.mxu0 0.0
    %318 = vmatpush1.xpose.msra.mxu0 0.0
    %319 = vmatprep.subr.mxu0 0.0
    %320 = vmatpush1.xpose.msra.mxu0 0.0
    %321 = vmatprep.subr.mxu0 0.0
    %322 = vmatpush1.xpose.msra.mxu0 0.0
    %323 = vmatprep.subr.mxu0 0.0
    %324 = vmatpush1.xpose.msra.mxu0 0.0
    %325 = vmatprep.subr.mxu0 0.0
    %326 = vmatpush1.xpose.msra.mxu0 0.0
    %327 = vmatprep.subr.mxu0 0.0
    %328 = vmatpush1.xpose.msra.mxu0 0.0
    %329 = vmatprep.subr.mxu0 0.0
    %330 = vmatpush1.xpose.msra.mxu0 0.0
    %331 = vmatprep.subr.mxu0 0.0
    %332 = vmatpush1.xpose.msra.mxu0 0.0
    %333 = vmatprep.subr.mxu0 0.0
    %334 = vmatpush1.xpose.msra.mxu0 0.0
    %335 = vmatprep.subr.mxu0 0.0
    %336 = vmatpush1.xpose.msra.mxu0 0.0
    %337 = vmatprep.subr.mxu0 0.0
    %338 = vmatpush1.xpose.msra.mxu0 0.0
    %339 = vmatprep.subr.mxu0 0.0
    %340 = vmatpush1.xpose.msra.mxu0 0.0
    %341 = vmatprep.subr.mxu0 0.0
    %342 = vmatpush1.xpose.msra.mxu0 0.0
    %343 = vmatprep.subr.mxu0 0.0
    %344 = vmatpush1.xpose.msra.mxu0 0.0
    %345 = vmatprep.subr.mxu0 0.0
    %346 = vmatpush1.xpose.msra.mxu0 0.0
    %347 = vmatprep.subr.mxu0 0.0
    %348 = vmatpush1.xpose.msra.mxu0 0.0
    %349 = vmatprep.mubr.f32.mxu0 0.0
    %350 = vmatmul.mubr.f32.gmra.mrb[0].mxu0 %v246
    %v351 = vpop.f32.mrb[0].mxu0
    %v352 = vadd.f32 %v283, %v351
    %v353 = vpop.f32.mrb[0].mxu0
    %354 = vmatprep.mubr.f32.mxu0 0.0
    %355 = vmatmul.mubr.f32.gmra.mrb[0].mxu0 %v247
    %v356 = vpop.f32.mrb[0].mxu0
    %v357 = vadd.f32 %v283, %v356
    %v358 = vpop.f32.mrb[0].mxu0
    %359 = vmatprep.mubr.f32.mxu0 0.0
    %360 = vmatmul.mubr.f32.gmra.mrb[0].mxu0 %v248
    %v361 = vpop.f32.mrb[0].mxu0
    %v362 = vadd.f32 %v283, %v361
    %v363 = vpop.f32.mrb[0].mxu0
    %364 = vmatprep.mubr.f32.mxu0 0.0
    %365 = vmatmul.mubr.f32.gmra.mrb[0].mxu0 %v249
    %v366 = vpop.f32.mrb[0].mxu0
    %v367 = vadd.f32 %v283, %v366
    %v368 = vpop.f32.mrb[0].mxu0
    %369 = vmatprep.mubr.f32.mxu0 0.0
    %370 = vmatmul.mubr.f32.gmra.mrb[0].mxu0 %v250
    %v371 = vpop.f32.mrb[0].mxu0
    %v372 = vadd.f32 %v283, %v371
    %v373 = vpop.f32.mrb[0].mxu0
    %374 = vmatprep.mubr.f32.mxu0 0.0
    %375 = vmatmul.mubr.f32.gmra.mrb[0].mxu0 %v251
    %v376 = vpop.f32.mrb[0].mxu0
    %v377 = vadd.f32 %v283, %v376
    %v378 = vpop.f32.mrb[0].mxu0
    %379 = vmatprep.mubr.f32.mxu0 0.0
    %380 = vmatmul.mubr.f32.gmra.mrb[0].mxu0 %v252
    %v381 = vpop.f32.mrb[0].mxu0
    %v382 = vadd.f32 %v283, %v381
    %v383 = vpop.f32.mrb[0].mxu0
    %384 = vmatprep.mubr.f32.mxu0 0.0
    %385 = vmatmul.mubr.f32.gmra.mrb[0].mxu0 %v253
    %v386 = vpop.f32.mrb[0].mxu0
    %v387 = vadd.f32 %v283, %v386
    %v388 = vpop.f32.mrb[0].mxu0
    %389 = vmatprep.mubr.f32.mxu0 0.0
    %390 = vmatmul.mubr.f32.gmra.mrb[0].mxu0 %v254
    %v391 = vpop.f32.mrb[0].mxu0
    %v392 = vadd.f32 %v283, %v391
    %v393 = vpop.f32.mrb[0].mxu0
    %394 = vmatprep.mubr.f32.mxu0 0.0
    %395 = vmatmul.mubr.f32.gmra.mrb[0].mxu0 %v255
    %v396 = vpop.f32.mrb[0].mxu0
    %v397 = vadd.f32 %v283, %v396
    %v398 = vpop.f32.mrb[0].mxu0
    %399 = vmatprep.mubr.f32.mxu0 0.0
    %400 = vmatmul.mubr.f32.gmra.mrb[0].mxu0 %v256
    %v401 = vpop.f32.mrb[0].mxu0
    %v402 = vadd.f32 %v283, %v401
    %v403 = vpop.f32.mrb[0].mxu0
    %404 = vmatprep.mubr.f32.mxu0 0.0
    %405 = vmatmul.mubr.f32.gmra.mrb[0].mxu0 %v257
    %v406 = vpop.f32.mrb[0].mxu0
    %v407 = vadd.f32 %v283, %v406
    %v408 = vpop.f32.mrb[0].mxu0
    %409 = vmatprep.mubr.f32.mxu0 0.0
    %410 = vmatmul.mubr.f32.gmra.mrb[0].mxu0 %v258
    %v411 = vpop.f32.mrb[0].mxu0
    %v412 = vadd.f32 %v283, %v411
    %v413 = vpop.f32.mrb[0].mxu0
    %414 = vmatprep.mubr.f32.mxu0 0.0
    %415 = vmatmul.mubr.f32.gmra.mrb[0].mxu0 %v259
    %v416 = vpop.f32.mrb[0].mxu0
    %v417 = vadd.f32 %v283, %v416
    %v418 = vpop.f32.mrb[0].mxu0
    %419 = vmatprep.mubr.f32.mxu0 0.0
    %420 = vmatmul.mubr.f32.gmra.mrb[0].mxu0 %v260
    %v421 = vpop.f32.mrb[0].mxu0
    %v422 = vadd.f32 %v283, %v421
    %v423 = vpop.f32.mrb[0].mxu0
    %424 = vmatprep.mubr.f32.mxu0 0.0
    %425 = vmatmul.mubr.f32.gmra.mrb[0].mxu0 %v261
    %v426 = vpop.f32.mrb[0].mxu0
    %v427 = vadd.f32 %v283, %v426
    %v428 = vpop.f32.mrb[0].mxu0
    %429 = vdwg.mxu0
    %v430 = vmul.f32 %v352, %v352
    %v431 = vmul.f32 %v357, %v357
    %v432 = vmul.f32 %v362, %v362
    %v433 = vmul.f32 %v367, %v367
    %v434 = vmul.f32 %v372, %v372
    %v435 = vmul.f32 %v377, %v377
    %v436 = vmul.f32 %v382, %v382
    %v437 = vmul.f32 %v387, %v387
    %v438 = vmul.f32 %v392, %v392
    %v439 = vmul.f32 %v397, %v397
    %v440 = vmul.f32 %v402, %v402
    %v441 = vmul.f32 %v407, %v407
    %v442 = vmul.f32 %v412, %v412
    %v443 = vmul.f32 %v417, %v417
    %v444 = vmul.f32 %v422, %v422
    %v445 = vmul.f32 %v427, %v427
    %446 = vadd.xlane.f32.xlu0 %v430
    %v447 = vpop.xlane.xlu0 %446
    %448 = vadd.xlane.f32.xlu0 %v431
    %v449 = vpop.xlane.xlu0 %448
    %450 = vadd.xlane.f32.xlu0 %v432
    %v451 = vpop.xlane.xlu0 %450
    %452 = vadd.xlane.f32.xlu0 %v433
    %v453 = vpop.xlane.xlu0 %452
    %454 = vadd.xlane.f32.xlu0 %v434
    %v455 = vpop.xlane.xlu0 %454
    %456 = vadd.xlane.f32.xlu0 %v435
    %v457 = vpop.xlane.xlu0 %456
    %458 = vadd.xlane.f32.xlu0 %v436
    %v459 = vpop.xlane.xlu0 %458
    %460 = vadd.xlane.f32.xlu0 %v437
    %v461 = vpop.xlane.xlu0 %460
    %462 = vadd.xlane.f32.xlu0 %v438
    %v463 = vpop.xlane.xlu0 %462
    %464 = vadd.xlane.f32.xlu0 %v439
    %v465 = vpop.xlane.xlu0 %464
    %466 = vadd.xlane.f32.xlu0 %v440
    %v467 = vpop.xlane.xlu0 %466
    %468 = vadd.xlane.f32.xlu0 %v441
    %v469 = vpop.xlane.xlu0 %468
    %470 = vadd.xlane.f32.xlu0 %v442
    %v471 = vpop.xlane.xlu0 %470
    %472 = vadd.xlane.f32.xlu0 %v443
    %v473 = vpop.xlane.xlu0 %472
    %474 = vadd.xlane.f32.xlu0 %v444
    %v475 = vpop.xlane.xlu0 %474
    %476 = vadd.xlane.f32.xlu0 %v445
    %v477 = vpop.xlane.xlu0 %476
    %v478 = vadd.f32 %v447, 1e-12
    %v479 = vadd.f32 %v449, 1e-12
    %v480 = vadd.f32 %v451, 1e-12
    %v481 = vadd.f32 %v453, 1e-12
    %v482 = vadd.f32 %v455, 1e-12
    %v483 = vadd.f32 %v457, 1e-12
    %v484 = vadd.f32 %v459, 1e-12
    %v485 = vadd.f32 %v461, 1e-12
    %v486 = vadd.f32 %v463, 1e-12
    %v487 = vadd.f32 %v465, 1e-12
    %v488 = vadd.f32 %v467, 1e-12
    %v489 = vadd.f32 %v469, 1e-12
    %v490 = vadd.f32 %v471, 1e-12
    %v491 = vadd.f32 %v473, 1e-12
    %v492 = vadd.f32 %v475, 1e-12
    %v493 = vadd.f32 %v477, 1e-12
    %v494 = vrsqrt.pop %v478
    %v495 = vrsqrt.pop %v479
    %v496 = vrsqrt.pop %v480
    %v497 = vrsqrt.pop %v481
    %v498 = vrsqrt.pop %v482
    %v499 = vrsqrt.pop %v483
    %v500 = vrsqrt.pop %v484
    %v501 = vrsqrt.pop %v485
    %v502 = vrsqrt.pop %v486
    %v503 = vrsqrt.pop %v487
    %v504 = vrsqrt.pop %v488
    %v505 = vrsqrt.pop %v489
    %v506 = vrsqrt.pop %v490
    %v507 = vrsqrt.pop %v491
    %v508 = vrsqrt.pop %v492
    %v509 = vrsqrt.pop %v493
    %v510 = vmul.f32 %v352, %v494
    %v511 = vmul.f32 %v357, %v495
    %v512 = vmul.f32 %v362, %v496
    %v513 = vmul.f32 %v367, %v497
    %v514 = vmul.f32 %v372, %v498
    %v515 = vmul.f32 %v377, %v499
    %v516 = vmul.f32 %v382, %v500
    %v517 = vmul.f32 %v387, %v501
    %v518 = vmul.f32 %v392, %v502
    %v519 = vmul.f32 %v397, %v503
    %v520 = vmul.f32 %v402, %v504
    %v521 = vmul.f32 %v407, %v505
    %v522 = vmul.f32 %v412, %v506
    %v523 = vmul.f32 %v417, %v507
    %v524 = vmul.f32 %v422, %v508
    %v525 = vmul.f32 %v427, %v509
    %526 = vst [vmem:[#allocation8] sm:$0xff] %v510
    %527 = vst [vmem:[#allocation8 + $0x8] sm:$0xff] %v511
    %528 = vst [vmem:[#allocation8 + $0x10] sm:$0xff] %v512
    %529 = vst [vmem:[#allocation8 + $0x18] sm:$0xff] %v513
    %530 = vst [vmem:[#allocation8 + $0x20] sm:$0xff] %v514
    %531 = vst [vmem:[#allocation8 + $0x28] sm:$0xff] %v515
    %532 = vst [vmem:[#allocation8 + $0x30] sm:$0xff] %v516
    %533 = vst [vmem:[#allocation8 + $0x38] sm:$0xff] %v517
    %534 = vst [vmem:[#allocation8 + $0x40] sm:$0xff] %v518
    %535 = vst [vmem:[#allocation8 + $0x48] sm:$0xff] %v519
    %536 = vst [vmem:[#allocation8 + $0x50] sm:$0xff] %v520
    %537 = vst [vmem:[#allocation8 + $0x58] sm:$0xff] %v521
    %538 = vst [vmem:[#allocation8 + $0x60] sm:$0xff] %v522
    %539 = vst [vmem:[#allocation8 + $0x68] sm:$0xff] %v523
    %540 = vst [vmem:[#allocation8 + $0x70] sm:$0xff] %v524
    %541 = vst [vmem:[#allocation8 + $0x78] sm:$0xff] %v525
    // Predicated region
    $region34: #{tpu_custom_call.1} parent=1 // pred_check
      _
    $region35: #{tpu_custom_call.1} parent=1 // pred_check_branch
      %543 = sbr.rel (0) target = $region37
    $region36: #{tpu_custom_call.1} parent=1 // pred_region
      %s545 = ssub.s32 2048, 2048
      %546 = vsyncadd [#allocation4], %s545
      %s547 = sshll.u32 [#allocation8], 4
      %s548 = int_to_ptr.vmem [resolvable:$true] %s547
      %553 = dma.vmem_to_hbm [thread:$0]  %s548, 2048, %s5, [#allocation4], 128, 128, 8
    $region37: #{tpu_custom_call.1} parent=1 // pred_fallthru
      _
    // Predicated region
    $region38: #{tpu_custom_call.1} parent=1 // pred_check
      _
    $region39: #{tpu_custom_call.1} parent=1 // pred_check_branch
      %555 = sbr.rel (0) target = $region41
    $region40: #{tpu_custom_call.1} parent=1 // pred_region
      %556 = dma.done [#allocation4], 2048
    $region41: #{tpu_custom_call.1} parent=1 // pred_fallthru
      _
    %557 = vsyncpa [#allocation3], 1
    %558 = vsyncpa [#allocation6], 1
    %559 = vsyncpa [#allocation4], 1

</llo_original>
